<compile_context>
chip_gen: v7x
topology: tpu7x:2x2x1
jax: 0.10.0
libtpu: 0.0.40
codegen_flags: <defaults>
</compile_context>

<pallas_src>
import functools

import jax
import jax.numpy as jnp
import numpy as np
from jax.experimental import pallas as pl
from jax.experimental.pallas import tpu as pltpu


def _pool_att_kernel(x_ref, w_ref, b_ref, att_ref, acc_ref, *, inv_hw):
    # x_ref: (C, T)  w_ref: (C, C)  b_ref: (C, 1)  att_ref: (C, 1)  acc_ref: (C, 1) f32
    t = pl.program_id(1)

    @pl.when(t == 0)
    def _():
        acc_ref[...] = jnp.zeros_like(acc_ref)

    # Partial spatial sum of this tile, accumulated in f32 across spatial tiles.
    acc_ref[...] += jnp.sum(x_ref[...].astype(jnp.float32), axis=-1, keepdims=True)

    @pl.when(t == pl.num_programs(1) - 1)
    def _():
        pooled = acc_ref[...] * inv_hw                                 # (C, 1) f32
        logits = jnp.dot(w_ref[...].astype(jnp.float32), pooled,
                         preferred_element_type=jnp.float32)
        logits = logits + b_ref[...].astype(jnp.float32)
        att_ref[...] = jax.nn.sigmoid(logits).astype(att_ref.dtype)


def _scale_kernel(x_ref, att_ref, o_ref):
    # x_ref/o_ref: (C, T)   att_ref: (C, 1).  Pure HBM-streaming multiply.
    o_ref[...] = x_ref[...] * att_ref[...]


def _choose_tile_hw(hw, c, itemsize, *, max_tile=2048, vmem_budget_bytes=8 << 20):
    """Pick a lane-aligned spatial tile whose double-buffered blocks fit the budget."""
    # Scale pass holds ~2x double-buffered (C, tile) blocks (x in + out):
    #   bytes/step ~= 4 * C * tile * itemsize
    budget_tile = vmem_budget_bytes // max(1, 4 * c * itemsize)
    cap = max(128, min(max_tile, int(budget_tile)))
    if hw <= cap:
        return hw                       # single tile; block equals full array dims
    t = (cap // 128) * 128
    while t >= 128:
        if hw % t == 0:                 # only even tilings -> no partial-tile masking
            return t
        t -= 128
    # No 128-aligned divisor of hw fits the cap: fall back to one full-row tile
    # (still correct; vmem_limit_bytes below gives it headroom).
    return hw


def channel_attention(x, weight, bias, *, max_tile_hw=2048, vmem_budget_bytes=8 << 20):
    """x: (B, C, H, W); weight: (C, C) or (C, C, 1, 1); bias: (C,). Returns (B, C, H, W)."""
    B, C, H, W = x.shape
    HW = H * W
    x_flat = x.reshape(B, C, HW)
    w = weight.reshape(C, C)
    b_col = bias.reshape(C, 1)

    tile = _choose_tile_hw(HW, C, x.dtype.itemsize,
                           max_tile=max_tile_hw, vmem_budget_bytes=vmem_budget_bytes)
    assert HW % tile == 0
    n_tiles = HW // tile

    vmem_cap = 32 * 1024 * 1024

    # Pass 1: global average pool -> CxC 1x1 conv -> sigmoid, one (C, 1) per batch.
    att = pl.pallas_call(
        functools.partial(_pool_att_kernel, inv_hw=1.0 / HW),
        out_shape=jax.ShapeDtypeStruct((B, C, 1), x.dtype),
        grid_spec=pltpu.PrefetchScalarGridSpec(
            num_scalar_prefetch=0,
            grid=(B, n_tiles),                                   # reduction axis last
            in_specs=[
                pl.BlockSpec((pl.Squeezed(), C, tile), lambda b, t: (b, 0, t)),
                pl.BlockSpec((C, C), lambda b, t: (0, 0)),
                pl.BlockSpec((C, 1), lambda b, t: (0, 0)),
            ],
            out_specs=pl.BlockSpec((pl.Squeezed(), C, 1), lambda b, t: (b, 0, 0)),
            scratch_shapes=[pltpu.VMEM((C, 1), jnp.float32)],
        ),
        compiler_params=pltpu.CompilerParams(
            dimension_semantics=("parallel", "arbitrary"),
            vmem_limit_bytes=vmem_cap),
    )(x_flat, w, b_col)

    # Pass 2: out = x * att, streamed in lane-dense (C, tile) blocks, fully parallel grid.
    out_flat = pl.pallas_call(
        _scale_kernel,
        out_shape=jax.ShapeDtypeStruct((B, C, HW), x.dtype),
        grid_spec=pltpu.PrefetchScalarGridSpec(
            num_scalar_prefetch=0,
            grid=(B, n_tiles),
            in_specs=[
                pl.BlockSpec((pl.Squeezed(), C, tile), lambda b, t: (b, 0, t)),
                pl.BlockSpec((pl.Squeezed(), C, 1), lambda b, t: (b, 0, 0)),
            ],
            out_specs=pl.BlockSpec((pl.Squeezed(), C, tile), lambda b, t: (b, 0, t)),
        ),
        compiler_params=pltpu.CompilerParams(
            dimension_semantics=("parallel", "parallel"),
            vmem_limit_bytes=vmem_cap),
    )(x_flat, att)

    return out_flat.reshape(B, C, H, W)


def channel_attention_ref(x, weight, bias):
    pooled = jnp.mean(x, axis=(2, 3), keepdims=True)            # (B, C, 1, 1)
    logits = jnp.einsum('ck,bkij->bcij', weight.reshape(x.shape[1], x.shape[1]),
                        pooled) + bias[None, :, None, None]
    return x * jax.nn.sigmoid(logits)


if __name__ == "__main__":
    key = jax.random.PRNGKey(0)
    k_x, k_w, k_b = jax.random.split(key, 3)

    # Small shape consistent with the module.
    B, C, H, W = 2, 4, 16, 16
    x = jax.random.normal(k_x, (B, C, H, W), dtype=jnp.float32)
    weight = jax.random.normal(k_w, (C, C), dtype=jnp.float32) * 0.1
    bias = jax.random.normal(k_b, (C,), dtype=jnp.float32) * 0.1

    out = jax.block_until_ready(channel_attention(x, weight, bias))
    ref = channel_attention_ref(x, weight, bias)
    np.testing.assert_allclose(np.asarray(out), np.asarray(ref), rtol=1e-5, atol=1e-5)

    # Larger spatial shape exercising the multi-tile (spatially tiled) path:
    # HW = 4096 > 2048-lane cap -> 2 spatial tiles, cross-tile mean accumulation.
    B2, C2, H2, W2 = 1, 8, 64, 64
    x2 = jax.random.normal(k_x, (B2, C2, H2, W2), dtype=jnp.float32)
    w2 = jax.random.normal(k_w, (C2, C2), dtype=jnp.float32) * 0.1
    b2 = jax.random.normal(k_b, (C2,), dtype=jnp.float32) * 0.1
    out2 = jax.block_until_ready(channel_attention(x2, w2, b2))
    ref2 = channel_attention_ref(x2, w2, b2)
    np.testing.assert_allclose(np.asarray(out2), np.asarray(ref2), rtol=1e-5, atol=1e-5)

    # bf16 streaming path (halves HBM traffic); accumulation / matmul stay f32 in-kernel.
    xb = x.astype(jnp.bfloat16)
    outb = jax.block_until_ready(channel_attention(xb, weight, bias))
    refb = channel_attention_ref(xb.astype(jnp.float32), weight, bias)
    np.testing.assert_allclose(np.asarray(outb.astype(jnp.float32)), np.asarray(refb),
                               rtol=6e-2, atol=6e-2)

    print("KERNEL_OK")
</pallas_src>

<mosaic_0001>
module attributes {stable_mosaic.version = 11 : i64} {
  func.func @_pool_att_kernel(%arg0: i32, %arg1: i32, %arg2: memref<1x4x256xf32, #tpu.memory_space<vmem>>, %arg3: memref<4x4xf32, #tpu.memory_space<vmem>>, %arg4: memref<4x1xf32, #tpu.memory_space<vmem>>, %arg5: memref<1x4x1xf32, #tpu.memory_space<vmem>>, %arg6: memref<4x1xf32, #tpu.memory_space<vmem>>) attributes {dimension_semantics = [#tpu.dimension_semantics<parallel>, #tpu.dimension_semantics<arbitrary>], iteration_bounds = array<i64: 2, 1>, scalar_prefetch = 0 : i64, scratch_operands = 1 : i64, tpu.core_type = #tpu.core_type<tc>, window_params = [{transform_indices = @transform_0, window_bounds = array<i64: 1, 4, 256>}, {pipeline_mode = #tpu.pipeline_mode<synchronous>, transform_indices = @transform_1, window_bounds = array<i64: 4, 4>}, {pipeline_mode = #tpu.pipeline_mode<synchronous>, transform_indices = @transform_2, window_bounds = array<i64: 4, 1>}, {transform_indices = @transform_3, window_bounds = array<i64: 1, 4, 1>}]} {
    %c0_i32 = arith.constant 0 : i32
    %0 = arith.cmpi eq, %arg1, %c0_i32 : i32
    %1 = arith.extui %0 : i1 to i32
    %c0_i32_0 = arith.constant 0 : i32
    %2 = arith.cmpi ne, %1, %c0_i32_0 : i32
    scf.if %2 {
      %cst_9 = arith.constant 0.000000e+00 : f32
      %13 = vector.broadcast %cst_9 : f32 to vector<4x1xf32>
      %c0_10 = arith.constant 0 : index
      %c0_11 = arith.constant 0 : index
      %14 = vector.load %arg6[%c0_10, %c0_11] : memref<4x1xf32, #tpu.memory_space<vmem>>, vector<4x1xf32>
      tpu.vector_store %arg6[%c0_10, %c0_11], %13 {strides = array<i32>} : memref<4x1xf32, #tpu.memory_space<vmem>>, vector<4x1xf32>,
    } else {
    }
    %c0 = arith.constant 0 : index
    %c0_1 = arith.constant 0 : index
    %3 = vector.load %arg6[%c0, %c0_1] : memref<4x1xf32, #tpu.memory_space<vmem>>, vector<4x1xf32>
    %c0_2 = arith.constant 0 : index
    %c0_3 = arith.constant 0 : index
    %c0_4 = arith.constant 0 : index
    %4 = vector.load %arg2[%c0_2, %c0_3, %c0_4] : memref<1x4x256xf32, #tpu.memory_space<vmem>>, vector<1x4x256xf32>
    %5 = vector.shape_cast %4 : vector<1x4x256xf32> to vector<4x256xf32>
    %cst = arith.constant dense<0.000000e+00> : vector<4xf32>
    %6 = vector.multi_reduction <add>, %5, %cst [1] : vector<4x256xf32> to vector<4xf32>
    %7 = vector.shape_cast %6 : vector<4xf32> to vector<4x1xf32>
    %8 = arith.addf %3, %7 : vector<4x1xf32>
    %c0_5 = arith.constant 0 : index
    %c0_6 = arith.constant 0 : index
    %9 = vector.load %arg6[%c0_5, %c0_6] : memref<4x1xf32, #tpu.memory_space<vmem>>, vector<4x1xf32>
    tpu.vector_store %arg6[%c0_5, %c0_6], %8 {strides = array<i32>} : memref<4x1xf32, #tpu.memory_space<vmem>>, vector<4x1xf32>,
    %c0_i32_7 = arith.constant 0 : i32
    %10 = arith.cmpi eq, %arg1, %c0_i32_7 : i32
    %11 = arith.extui %10 : i1 to i32
    %c0_i32_8 = arith.constant 0 : i32
    %12 = arith.cmpi ne, %11, %c0_i32_8 : i32
    scf.if %12 {
      %c0_9 = arith.constant 0 : index
      %c0_10 = arith.constant 0 : index
      %13 = vector.load %arg6[%c0_9, %c0_10] : memref<4x1xf32, #tpu.memory_space<vmem>>, vector<4x1xf32>
      %cst_11 = arith.constant 3.906250e-03 : f32
      %14 = vector.broadcast %cst_11 : f32 to vector<4x1xf32>
      %15 = arith.mulf %13, %14 : vector<4x1xf32>
      %c0_12 = arith.constant 0 : index
      %c0_13 = arith.constant 0 : index
      %16 = vector.load %arg3[%c0_12, %c0_13] : memref<4x4xf32, #tpu.memory_space<vmem>>, vector<4x4xf32>
      %cst_14 = arith.constant dense<0.000000e+00> : vector<4x1xf32>
      %17 = tpu.matmul %16, %15, %cst_14 {dimension_numbers = #tpu.dot_dimension_numbers<[1], [0], [0], [1], [0, 0, 1, 1], [], []>} : vector<4x4xf32>, vector<4x1xf32>, vector<4x1xf32> -> vector<4x1xf32>
      %c0_15 = arith.constant 0 : index
      %c0_16 = arith.constant 0 : index
      %18 = vector.load %arg4[%c0_15, %c0_16] : memref<4x1xf32, #tpu.memory_space<vmem>>, vector<4x1xf32>
      %19 = arith.addf %17, %18 : vector<4x1xf32>
      %20 = arith.negf %19 : vector<4x1xf32>
      %21 = math.exp %20 : vector<4x1xf32>
      %cst_17 = arith.constant 1.000000e+00 : f32
      %22 = vector.broadcast %cst_17 : f32 to vector<4x1xf32>
      %23 = arith.addf %22, %21 : vector<4x1xf32>
      %24 = arith.divf %22, %23 : vector<4x1xf32>
      %c0_18 = arith.constant 0 : index
      %c0_19 = arith.constant 0 : index
      %c0_20 = arith.constant 0 : index
      %25 = vector.load %arg5[%c0_18, %c0_19, %c0_20] : memref<1x4x1xf32, #tpu.memory_space<vmem>>, vector<1x4x1xf32>
      %26 = vector.shape_cast %25 : vector<1x4x1xf32> to vector<4x1xf32>
      %27 = vector.shape_cast %24 : vector<4x1xf32> to vector<1x4x1xf32>
      tpu.vector_store %arg5[%c0_18, %c0_19, %c0_20], %27 {strides = array<i32>} : memref<1x4x1xf32, #tpu.memory_space<vmem>>, vector<1x4x1xf32>,
    } else {
    }
    return
  }
  func.func @transform_0(%arg0: i32, %arg1: i32) -> (i32, i32, i32) {
    %c0_i32 = arith.constant 0 : i32
    %c0_i32_0 = arith.constant 0 : i32
    return %arg0, %c0_i32, %arg1 : i32, i32, i32
  }
  func.func @transform_1(%arg0: i32, %arg1: i32) -> (i32, i32) {
    %c0_i32 = arith.constant 0 : i32
    %c0_i32_0 = arith.constant 0 : i32
    %c0_i32_1 = arith.constant 0 : i32
    return %c0_i32, %c0_i32_0 : i32, i32
  }
  func.func @transform_2(%arg0: i32, %arg1: i32) -> (i32, i32) {
    %c0_i32 = arith.constant 0 : i32
    %c0_i32_0 = arith.constant 0 : i32
    %c0_i32_1 = arith.constant 0 : i32
    return %c0_i32, %c0_i32_0 : i32, i32
  }
  func.func @transform_3(%arg0: i32, %arg1: i32) -> (i32, i32, i32) {
    %c0_i32 = arith.constant 0 : i32
    %c0_i32_0 = arith.constant 0 : i32
    %c0_i32_1 = arith.constant 0 : i32
    return %arg0, %c0_i32, %c0_i32_0 : i32, i32, i32
  }
}

</mosaic_0001>

<llo_original>
// kernel: tpu_custom_call.1
$region0: #{tpu_custom_call.1}
  #allocation0 [shape = 'u32[]', space=smem, size = 0x4, offset = 0x4, fixed_abs, tag = 'smem constant byte address 0x4 - core index']
  #allocation1 [shape = 'u32[144,128]{1,0:T(1,128)}', space=vmem, size = 0x12000, scoped, tag = 'internal scratch']
  #allocation2 [shape = 'f32[4,1]{1,0:T(4,128)}', space=vmem, size = 0x800, scoped, tag = 'scratch operand']
  %s0 = inlined_call_operand.hbm [shape: f32[2,4,256], index: 0, kind: input, shape index: {}]
  %s1 = inlined_call_operand.vmem [shape: f32[4,4], index: 1, kind: input, shape index: {}]
  %s2 = inlined_call_operand.vmem [shape: f32[4,1], index: 2, kind: input, shape index: {}]
  %s3 = inlined_call_operand.vmem [shape: f32[2,4,1], index: 3, kind: output, shape index: {}]
  %s4 = sld [smem:[#allocation0]]
  $region57: #{tpu_custom_call.1} parent=0
    _
  %s6 = ssub.s32 1, %s4
  %s7 = scalar_select 0, %s6, %s4
  $region1: #{tpu_custom_call.1} parent=0
    #allocation3 [shape = 'u8[8192]{0}', space=vmem, size = 0x2000, scoped, tag = 'input window, operand 0']
    #allocation4 [shape = 's32[2]{0}', space=sflag, size = 0x8, scoped, tag = 'scoped memory for tpu_custom_call.1']
    %8 = vsyncpa [#allocation4], 0
    %s9 = scalar_lea.sflag [#allocation4], 1
    %10 = vsyncpa %s9, 0
    loop: start=0, step=1, limit=4
    $region2: #{tpu_custom_call.1} parent=1 // loop_pre_header
      _
    $region3: #{tpu_custom_call.1} parent=1 // loop_header
      %s12 = sphi 0, %s16
      %p13 = scmp.ge.s32.totalorder %s12, 4
      %s19 = sphi 0, %s31
      %s20 = sphi 0, %s27
      %s21 = sphi 0, %s19
      %s22 = sphi 0, %s20
      %s23 = sphi 0, %s21
      %s24 = sphi 0, %s22
      %s36 = sphi 0, %s38
      %s39 = sphi 0, %s36
      %s40 = sphi 0, %s39
      %s56 = sphi 0, %s40
      %s60 = sphi 0, %s60
      %s62 = sphi 0, %s60
      %s63 = sphi 0, %s62
      %s77 = sphi 0, %s63
      %s81 = sphi 0, %s81
      %s83 = sphi 0, %s81
      %s84 = sphi 0, %s83
      %s98 = sphi 0, %s84
      %s104 = sphi 0, %s106
      %s107 = sphi 0, %s104
      %s108 = sphi 0, %s107
      %s124 = sphi 0, %s108
    $region4: #{tpu_custom_call.1} parent=1 // loop_header_branch
      %15 = sbr.rel (%p13) target = $region8
    $region5: #{tpu_custom_call.1} parent=1 // loop_body
      %s17 = ssub.s32 %s12, 1
      %s18 = ssub.s32 %s12, 2
      %s25 = sadd.s32 1, %s20
      %p26 = scmp.ge.s32.totalorder %s25, 1
      %s27 = scalar_select %p26, 0, %s25
      %s28 = sadd.s32 1, %s19
      %s29 = scalar_select %p26, %s28, %s19
      %p30 = scmp.ge.s32.totalorder %s29, 2
      %s31 = scalar_select %p30, 0, %s29
      %s32 = ssub.s32 %s19, %s31
      %s33 = ssub.s32 %s20, %s27
      %s34 = sor.u32 %s32, %s33
      %p35 = scmp.eq.s32.totalorder %s34, 0
      %s37 = sadd.s32 %s36, 1
      %s38 = scalar_select %p35, %s36, %s37
      %p41 = pneg %p35
      %p42 = scmp.eq.s32.totalorder %s12, 1
      %p43 = por %p41, %p42
      %p44 = scmp.ne.s32.totalorder %s36, %s39
      %p45 = scmp.eq.s32.totalorder %s12, 0
      %p46 = por %p44, %p45
      %p47 = scmp.ne.s32.totalorder %s36, %s39
      %p48 = scmp.eq.s32.totalorder %s17, 1
      %p49 = por %p47, %p48
      %p50 = scmp.ne.s32.totalorder %s39, %s40
      %p51 = scmp.eq.s32.totalorder %s17, 0
      %p52 = por %p50, %p51
      %p53 = scmp.ne.s32.totalorder %s39, %s40
      %p54 = scmp.eq.s32.totalorder %s18, 1
      %p55 = por %p53, %p54
      %p57 = scmp.ne.s32.totalorder %s40, %s56
      %p58 = scmp.eq.s32.totalorder %s18, 0
      %p59 = por %p57, %p58
      %s61 = sadd.s32 %s60, 1
      %p64 = scmp.eq.s32.totalorder %s12, 1
      %p65 = scmp.ne.s32.totalorder %s60, %s62
      %p66 = scmp.eq.s32.totalorder %s12, 0
      %p67 = por %p65, %p66
      %p68 = scmp.ne.s32.totalorder %s60, %s62
      %p69 = scmp.eq.s32.totalorder %s17, 1
      %p70 = por %p68, %p69
      %p71 = scmp.ne.s32.totalorder %s62, %s63
      %p72 = scmp.eq.s32.totalorder %s17, 0
      %p73 = por %p71, %p72
      %p74 = scmp.ne.s32.totalorder %s62, %s63
      %p75 = scmp.eq.s32.totalorder %s18, 1
      %p76 = por %p74, %p75
      %p78 = scmp.ne.s32.totalorder %s63, %s77
      %p79 = scmp.eq.s32.totalorder %s18, 0
      %p80 = por %p78, %p79
      %s82 = sadd.s32 %s81, 1
      %p85 = scmp.eq.s32.totalorder %s12, 1
      %p86 = scmp.ne.s32.totalorder %s81, %s83
      %p87 = scmp.eq.s32.totalorder %s12, 0
      %p88 = por %p86, %p87
      %p89 = scmp.ne.s32.totalorder %s81, %s83
      %p90 = scmp.eq.s32.totalorder %s17, 1
      %p91 = por %p89, %p90
      %p92 = scmp.ne.s32.totalorder %s83, %s84
      %p93 = scmp.eq.s32.totalorder %s17, 0
      %p94 = por %p92, %p93
      %p95 = scmp.ne.s32.totalorder %s83, %s84
      %p96 = scmp.eq.s32.totalorder %s18, 1
      %p97 = por %p95, %p96
      %p99 = scmp.ne.s32.totalorder %s84, %s98
      %p100 = scmp.eq.s32.totalorder %s18, 0
      %p101 = por %p99, %p100
      %s102 = ssub.s32 %s19, %s31
      %p103 = scmp.eq.s32.totalorder %s102, 0
      %s105 = sadd.s32 %s104, 1
      %s106 = scalar_select %p103, %s104, %s105
      %p109 = pneg %p103
      %p110 = scmp.eq.s32.totalorder %s12, 1
      %p111 = por %p109, %p110
      %p112 = scmp.ne.s32.totalorder %s104, %s107
      %p113 = scmp.eq.s32.totalorder %s12, 0
      %p114 = por %p112, %p113
      %p115 = scmp.ne.s32.totalorder %s104, %s107
      %p116 = scmp.eq.s32.totalorder %s17, 1
      %p117 = por %p115, %p116
      %p118 = scmp.ne.s32.totalorder %s107, %s108
      %p119 = scmp.eq.s32.totalorder %s17, 0
      %p120 = por %p118, %p119
      %p121 = scmp.ne.s32.totalorder %s107, %s108
      %p122 = scmp.eq.s32.totalorder %s18, 1
      %p123 = por %p121, %p122
      %p125 = scmp.ne.s32.totalorder %s108, %s124
      %p126 = scmp.eq.s32.totalorder %s18, 0
      %p127 = por %p125, %p126
      %p128 = scmp.le.s32.totalorder 1, %s12
      %p129 = scmp.lt.s32.totalorder %s12, 3
      %p130 = pnand %p128, %p129
      %p131 = pneg %p130
      // Predicated region
      $region9: #{tpu_custom_call.1} parent=5 // pred_check
        _
      $region10: #{tpu_custom_call.1} parent=5 // pred_check_branch
        %133 = sbr.rel (%p130) target = $region12
      $region11: #{tpu_custom_call.1} parent=5 // pred_region
        %s134 = ssub.s32 %s12, 1
        // Predicated region
        $region13: #{tpu_custom_call.1} parent=11 // pred_check
          %p135 = pneg %p73
        $region14: #{tpu_custom_call.1} parent=11 // pred_check_branch
          %137 = sbr.rel (%p135) target = $region16
        $region15: #{tpu_custom_call.1} parent=11 // pred_region
          _
        $region16: #{tpu_custom_call.1} parent=11 // pred_fallthru
          _
        // Predicated region
        $region17: #{tpu_custom_call.1} parent=11 // pred_check
          %p138 = pneg %p94
        $region18: #{tpu_custom_call.1} parent=11 // pred_check_branch
          %140 = sbr.rel (%p138) target = $region20
        $region19: #{tpu_custom_call.1} parent=11 // pred_region
          _
        $region20: #{tpu_custom_call.1} parent=11 // pred_fallthru
          _
      $region12: #{tpu_custom_call.1} parent=5 // pred_fallthru
        _
      %p141 = scmp.lt.s32.totalorder %s12, 2
      // Predicated region
      $region21: #{tpu_custom_call.1} parent=5 // pred_check
        %p142 = pneg %p141
      $region22: #{tpu_custom_call.1} parent=5 // pred_check_branch
        %144 = sbr.rel (%p142) target = $region24
      $region23: #{tpu_custom_call.1} parent=5 // pred_region
        // Predicated region
        $region25: #{tpu_custom_call.1} parent=23 // pred_check
          %p145 = pneg %p46
        $region26: #{tpu_custom_call.1} parent=23 // pred_check_branch
          %147 = sbr.rel (%p145) target = $region28
        $region27: #{tpu_custom_call.1} parent=23 // pred_region
          %s148 = sand.u32 %s36, 1
          %s149 = scalar_lea.sflag [#allocation4], %s148
          %s150 = sand.u32 %s36, 1
          %s151 = smul.addr %s150, 8
          %s152 = scalar_lea.vmem [#allocation3], %s151
          %s153 = smul.u32 2, %s20
          %s155 = ssub.s32 128, 128
          %156 = vsyncadd %s149, %s155
          %s157 = smul.addr %s19, 2
          %s158 = sadd.s32 %s153, %s157
          %s159 = smul.addr %s158, 64
          %s160 = scalar_lea.hbm %s0, %s159
          %s162 = sshll.u32 %s152, 4
          %s163 = int_to_ptr.vmem [resolvable:$true] %s162
          %165 = dma.hbm_to_vmem [thread:$0]  %s160, 128, %s163, %s149
        $region28: #{tpu_custom_call.1} parent=23 // pred_fallthru
          _
      $region24: #{tpu_custom_call.1} parent=5 // pred_fallthru
        _
      %p166 = scmp.le.s32.totalorder 1, %s12
      %p167 = scmp.lt.s32.totalorder %s12, 3
      %p168 = pnand %p166, %p167
      %p169 = pneg %p168
      // Predicated region
      $region29: #{tpu_custom_call.1} parent=5 // pred_check
        _
      $region30: #{tpu_custom_call.1} parent=5 // pred_check_branch
        %171 = sbr.rel (%p168) target = $region32
      $region31: #{tpu_custom_call.1} parent=5 // pred_region
        %s172 = ssub.s32 %s12, 1
        %s173 = sand.u32 %s39, 1
        %s174 = scalar_lea.sflag [#allocation4], %s173
        %s175 = sand.u32 %s39, 1
        %s176 = smul.addr %s175, 8
        %s177 = scalar_lea.vmem [#allocation3], %s176
        // Predicated region
        $region33: #{tpu_custom_call.1} parent=31 // pred_check
          %p178 = pneg %p52
        $region34: #{tpu_custom_call.1} parent=31 // pred_check_branch
          %180 = sbr.rel (%p178) target = $region36
        $region35: #{tpu_custom_call.1} parent=31 // pred_region
          %181 = dma.done %s174, 128
        $region36: #{tpu_custom_call.1} parent=31 // pred_fallthru
          _
        %s182 = sand.u32 %s39, 1
        %s183 = scalar_lea.sflag [#allocation4], %s182
        %s184 = sand.u32 %s39, 1
        %s185 = smul.addr %s184, 8
        %s186 = scalar_lea.vmem [#allocation3], %s185
        %p187 = pneg %p52
        %p188 = pneg %p49
        %p189 = pneg %p73
        %p190 = pneg %p70
        %p191 = pneg %p94
        %p192 = pneg %p91
        %p193 = pneg %p120
        %p194 = pneg %p117
        %p195 = scmp.lt.s32.totalorder %s21, 1
        %s196 = scalar_select %p195, %s21, 1
        %s197 = smul.addr %s196, 4
        %s198 = scalar_lea.vmem %s3, %s197
        %s199 = smul.u32 2, %s22
        %p200 = scmp.lt.s32.totalorder %s21, 1
        %s201 = scalar_select %p200, %s21, 1
        %s202 = smul.addr %s201, 4
        %s203 = scalar_lea.vmem %s3, %s202
        %p204 = scmp.eq.s32.totalorder %s22, 0
        // Predicated region
        $region37: #{tpu_custom_call.1} parent=31 // pred_check
          %p205 = pneg %p204
        $region38: #{tpu_custom_call.1} parent=31 // pred_check_branch
          %207 = sbr.rel (%p205) target = $region40
        $region39: #{tpu_custom_call.1} parent=31 // pred_region
          %vm208 = vcmask 3072
          %209 = vst.msk [vmem:[#allocation2] sm:$0xf] %vm208, 0.0
        $region40: #{tpu_custom_call.1} parent=31 // pred_fallthru
          _
        %v210 = vld [vmem:[#allocation2] sm:$0xf]
        %v211 = vld [vmem:[%s177] sm:$0xff]
        %v213 = vcombine.high %v211, %v211
        %vm215 = vcmask 1043456
        %v216 = vsel %vm215, %v211, 0.0
        %v217 = vsel %vm215, %v213, 0.0
        %v218 = vadd.f32 %v216, %v217
        %219 = vadd.xlane.f32.xlu0 %v218
        %v220 = vpop.xlane.xlu0 %219
        %v221 = vadd.f32 %v210, %v220
        %vm222 = vcmask 3072
        %223 = vst.msk [vmem:[#allocation2] sm:$0xf] %vm222, %v221
        // Predicated region
        $region41: #{tpu_custom_call.1} parent=31 // pred_check
          %p224 = pneg %p204
        $region42: #{tpu_custom_call.1} parent=31 // pred_check_branch
          %226 = sbr.rel (%p224) target = $region44
        $region43: #{tpu_custom_call.1} parent=31 // pred_region
          %v227 = vld [vmem:[#allocation2] sm:$0xf]
          %v228 = vmul.f32 %v227, 0.00390625
          %v229 = vld [vmem:[%s1] sm:$0xf]
          %v230 = vld [vmem:[%s2] sm:$0xf]
          %vm231 = vcmask 31744
          %v233 = vsel %vm231, %v229, 0
          %v236 = vsel %vm215, %v228, 0
          %238 = vmatprep.subr.mxu0 0.0
          %239 = vmatpush1.msra.mxu0 %v236
          %240 = vmatprep.subr.mxu0 0.0
          %241 = vmatpush1.msra.mxu0 0.0
          %242 = vmatprep.subr.mxu0 0.0
          %243 = vmatpush1.msra.mxu0 0.0
          %244 = vmatprep.subr.mxu0 0.0
          %245 = vmatpush1.msra.mxu0 0.0
          %246 = vmatprep.subr.mxu0 0.0
          %247 = vmatpush1.msra.mxu0 0.0
          %248 = vmatprep.subr.mxu0 0.0
          %249 = vmatpush1.msra.mxu0 0.0
          %250 = vmatprep.subr.mxu0 0.0
          %251 = vmatpush1.msra.mxu0 0.0
          %252 = vmatprep.subr.mxu0 0.0
          %253 = vmatpush1.msra.mxu0 0.0
          %254 = vmatprep.subr.mxu0 0.0
          %255 = vmatpush1.msra.mxu0 0.0
          %256 = vmatprep.subr.mxu0 0.0
          %257 = vmatpush1.msra.mxu0 0.0
          %258 = vmatprep.subr.mxu0 0.0
          %259 = vmatpush1.msra.mxu0 0.0
          %260 = vmatprep.subr.mxu0 0.0
          %261 = vmatpush1.msra.mxu0 0.0
          %262 = vmatprep.subr.mxu0 0.0
          %263 = vmatpush1.msra.mxu0 0.0
          %264 = vmatprep.subr.mxu0 0.0
          %265 = vmatpush1.msra.mxu0 0.0
          %266 = vmatprep.subr.mxu0 0.0
          %267 = vmatpush1.msra.mxu0 0.0
          %268 = vmatprep.subr.mxu0 0.0
          %269 = vmatpush1.msra.mxu0 0.0
          %270 = vmatprep.subr.mxu0 0.0
          %271 = vmatpush1.msra.mxu0 0.0
          %272 = vmatprep.subr.mxu0 0.0
          %273 = vmatpush1.msra.mxu0 0.0
          %274 = vmatprep.subr.mxu0 0.0
          %275 = vmatpush1.msra.mxu0 0.0
          %276 = vmatprep.subr.mxu0 0.0
          %277 = vmatpush1.msra.mxu0 0.0
          %278 = vmatprep.subr.mxu0 0.0
          %279 = vmatpush1.msra.mxu0 0.0
          %280 = vmatprep.subr.mxu0 0.0
          %281 = vmatpush1.msra.mxu0 0.0
          %282 = vmatprep.subr.mxu0 0.0
          %283 = vmatpush1.msra.mxu0 0.0
          %284 = vmatprep.subr.mxu0 0.0
          %285 = vmatpush1.msra.mxu0 0.0
          %286 = vmatprep.subr.mxu0 0.0
          %287 = vmatpush1.msra.mxu0 0.0
          %288 = vmatprep.subr.mxu0 0.0
          %289 = vmatpush1.msra.mxu0 0.0
          %290 = vmatprep.subr.mxu0 0.0
          %291 = vmatpush1.msra.mxu0 0.0
          %292 = vmatprep.subr.mxu0 0.0
          %293 = vmatpush1.msra.mxu0 0.0
          %294 = vmatprep.subr.mxu0 0.0
          %295 = vmatpush1.msra.mxu0 0.0
          %296 = vmatprep.subr.mxu0 0.0
          %297 = vmatpush1.msra.mxu0 0.0
          %298 = vmatprep.subr.mxu0 0.0
          %299 = vmatpush1.msra.mxu0 0.0
          %300 = vmatprep.subr.mxu0 0.0
          %301 = vmatpush1.msra.mxu0 0.0
          %302 = vmatprep.mubr.f32.mxu0 0.0
          %303 = vmatmul.mubr.f32.gmra.mrb[0].mxu0 %v233
          %v304 = vpop.f32.mrb[0].mxu0
          %v305 = vadd.f32 %v230, %v304
          %v306 = vpop.f32.mrb[0].mxu0
          %307 = vdwg.mxu0
          %v308 = vxor.u32 %v305, 2147483648
          %v309 = vmul.f32 %v308, 1.442695
          %v310 = vpow.pop %v309
          %v311 = vadd.f32 %v310, 1.0
          %v312 = vrcp.pop %v311
          %v313 = vmul.f32 1.0, %v312
          %314 = vst.msk [vmem:[%s203] sm:$0xf] %vm222, %v313
        $region44: #{tpu_custom_call.1} parent=31 // pred_fallthru
          _
        %p315 = scmp.lt.s32.totalorder %s21, 1
        %s316 = scalar_select %p315, %s21, 1
        %s317 = smul.addr %s316, 4
        %s318 = scalar_lea.vmem %s3, %s317
        // Predicated region
        $region45: #{tpu_custom_call.1} parent=31 // pred_check
          %p319 = pneg %p117
        $region46: #{tpu_custom_call.1} parent=31 // pred_check_branch
          %321 = sbr.rel (%p319) target = $region48
        $region47: #{tpu_custom_call.1} parent=31 // pred_region
          _
        $region48: #{tpu_custom_call.1} parent=31 // pred_fallthru
          _
      $region32: #{tpu_custom_call.1} parent=5 // pred_fallthru
        _
      %p322 = scmp.le.s32.totalorder 2, %s12
      // Predicated region
      $region49: #{tpu_custom_call.1} parent=5 // pred_check
        %p323 = pneg %p322
      $region50: #{tpu_custom_call.1} parent=5 // pred_check_branch
        %325 = sbr.rel (%p323) target = $region52
      $region51: #{tpu_custom_call.1} parent=5 // pred_region
        %s326 = ssub.s32 %s12, 2
        // Predicated region
        $region53: #{tpu_custom_call.1} parent=51 // pred_check
          %p327 = pneg %p123
        $region54: #{tpu_custom_call.1} parent=51 // pred_check_branch
          %329 = sbr.rel (%p327) target = $region56
        $region55: #{tpu_custom_call.1} parent=51 // pred_region
          %p330 = scmp.lt.s32.totalorder %s23, 1
          %s331 = scalar_select %p330, %s23, 1
          %s332 = smul.addr %s331, 4
          %s333 = scalar_lea.vmem %s3, %s332
        $region56: #{tpu_custom_call.1} parent=51 // pred_fallthru
          _
      $region52: #{tpu_custom_call.1} parent=5 // pred_fallthru
        _
    $region6: #{tpu_custom_call.1} parent=1 // loop_footer
      %s16 = sadd.s32 1, %s12
    $region7: #{tpu_custom_call.1} parent=1 // loop_footer_branch
      %11 = sbr.rel target = $region3
    $region8: #{tpu_custom_call.1} parent=1 // loop_exit
      _
    %334 = vsyncpa [#allocation4], 1
    %s335 = scalar_lea.sflag [#allocation4], 1
    %336 = vsyncpa %s335, 1

</llo_original>
